<compile_context>
chip_gen: v7x
topology: tpu7x:2x2x1
jax: 0.10.0
libtpu: 0.0.40
codegen_flags: <defaults>
</compile_context>

<pallas_src>
from typing import NamedTuple

import jax
import jax.numpy as jnp
from jax.experimental import pallas as pl
from jax.experimental.pallas import tpu as pltpu


def _round_up(x, m):
    return (x + m - 1) // m * m


def _cdiv(a, b):
    return -(-a // b)


class PreparedParams(NamedTuple):
    """Kernel-ready parameters (built once per parameter update)."""
    w1: jax.Array   # [S,  fc1] bf16
    w2: jax.Array   # [fc1, fc2] bf16
    w3: jax.Array   # [fc2, AP]  bf16  (dueling head folded in, action dim padded to 128x)
    b:  jax.Array   # [1, fc1p + fc2p + AP] f32  (b1 | b2 | b3 at 128-aligned offsets)


def prepare_params(params, *, apply_dueling: bool) -> PreparedParams:
    """Hoisted, once-per-update prep: dueling fold, pads, bf16 casts, bias concat."""
    w1, b1, w2, b2, w3, b3, wv, bv = params
    A = w3.shape[1]

    # Algebraic fusion of the dueling state-value head:
    #   (h2 @ wv + bv) broadcast over actions == h2 @ (w3 + wv) + (b3 + bv)
    if apply_dueling:
        w3 = w3 + wv            # [fc2, A] + [fc2, 1]
        b3 = b3 + bv            # [1, A]  + [1, 1]

    fc1, fc2 = w1.shape[1], w2.shape[1]
    AP = _round_up(A, 128)                       # lane-dense output (>= 128 wide)
    w3p = jnp.pad(w3, ((0, 0), (0, AP - A)))
    b3p = jnp.pad(b3, ((0, 0), (0, AP - A)))

    # Single concatenated bias array, each segment at a 128-aligned lane offset.
    o1 = 0
    o2 = _round_up(fc1, 128)
    o3 = o2 + _round_up(fc2, 128)
    total = o3 + AP
    bcat = jnp.zeros((1, total), jnp.float32)
    bcat = bcat.at[:, o1:o1 + fc1].set(b1.astype(jnp.float32))
    bcat = bcat.at[:, o2:o2 + fc2].set(b2.astype(jnp.float32))
    bcat = bcat.at[:, o3:o3 + AP].set(b3p.astype(jnp.float32))

    return PreparedParams(
        w1=w1.astype(jnp.bfloat16),
        w2=w2.astype(jnp.bfloat16),
        w3=w3p.astype(jnp.bfloat16),
        b=bcat,
    )


def _make_qnet_kernel(fc1, fc2, ap, o1, o2, o3):
    def kernel(x_ref, w1_ref, w2_ref, w3_ref, b_ref, o_ref):
        # fc1 (bf16 MXU, f32 accumulate) + bias + relu (f32 VPU epilogue)
        h1 = jnp.dot(x_ref[...], w1_ref[...], preferred_element_type=jnp.float32)
        h1 = jnp.maximum(h1 + b_ref[:, o1:o1 + fc1], 0.0)
        # fc2 + bias + relu
        h2 = jnp.dot(h1.astype(jnp.bfloat16), w2_ref[...],
                     preferred_element_type=jnp.float32)
        h2 = jnp.maximum(h2 + b_ref[:, o2:o2 + fc2], 0.0)
        # fc3 (dueling value head already folded into w3/b by prepare_params)
        q = jnp.dot(h2.astype(jnp.bfloat16), w3_ref[...],
                    preferred_element_type=jnp.float32)
        o_ref[...] = (q + b_ref[:, o3:o3 + ap]).astype(o_ref.dtype)
    return kernel


def _pick_row_tiling(B):
    """Choose (row_tile, padded_rows)."""
    bp16 = _round_up(B, 16)                       # bf16 sublane packing
    if bp16 <= 128:
        return bp16, bp16                          # single small tile
    if bp16 <= 512:
        # >= 2 tiles -> both v7x TensorCores get work; 128-multiple for v5e MXU.
        tb = _round_up(_cdiv(bp16, 2), 128)
    else:
        # Large batches: 512-row tiles (256-multiple fills the 256-wide MXU on
        # v6e/v7x) to amortize the ~0.35us per-grid-step overhead.
        tb = 512
    return tb, _round_up(bp16, tb)


def qnetwork_forward(state, prepared: PreparedParams, *, action_size: int,
                     out_dtype=jnp.float32):
    """Fused QNetwork forward pass on TPU via Pallas.

    `prepared` comes from prepare_params() (call it once per parameter update,
    NOT per forward call).  For very large batches pass out_dtype=jnp.bfloat16
    to halve the HBM output writeback (the roofline on v5e).
    """
    B, S = state.shape
    fc1 = prepared.w1.shape[1]
    fc2 = prepared.w2.shape[1]
    AP = prepared.w3.shape[1]
    A = action_size
    o1 = 0
    o2 = _round_up(fc1, 128)
    o3 = o2 + _round_up(fc2, 128)

    # Row tiling: pad batch, grid over row tiles.
    TB, BP = _pick_row_tiling(B)
    xp = jnp.pad(state, ((0, BP - B), (0, 0))).astype(jnp.bfloat16)
    # TODO(synk): if a bundle dump shows relayout around the K=8 fc1 matmul,
    # pad S/w1-rows to 128 in prepare_params (extra zero MACs are MXU-free).

    const = lambda arr: pl.BlockSpec(arr.shape, lambda i: (0,) * arr.ndim)

    out = pl.pallas_call(
        _make_qnet_kernel(fc1, fc2, AP, o1, o2, o3),
        out_shape=jax.ShapeDtypeStruct((BP, AP), out_dtype),
        grid_spec=pltpu.PrefetchScalarGridSpec(
            num_scalar_prefetch=0,
            grid=(BP // TB,),
            in_specs=[
                pl.BlockSpec((TB, S), lambda i: (i, 0)),   # state rows tiled
                const(prepared.w1),                        # weights VMEM-resident
                const(prepared.w2),
                const(prepared.w3),
                const(prepared.b),                         # fused bias array
            ],
            out_specs=pl.BlockSpec((TB, AP), lambda i: (i, 0)),
        ),
        compiler_params=pltpu.CompilerParams(
            # Batch tiles are independent -> shard across TensorCores (v7x).
            dimension_semantics=("parallel",),
        ),
    )(xp, prepared.w1, prepared.w2, prepared.w3, prepared.b)

    return out[:B, :A]


def init_params(key, state_size, action_size, fc1_units=128, fc2_units=128):
    """Deterministic init mimicking torch.nn.Linear default (U[-1/sqrt(fan_in), +])."""
    def linear(k, fan_in, fan_out):
        kw, kb = jax.random.split(k)
        bound = 1.0 / jnp.sqrt(fan_in)
        w = jax.random.uniform(kw, (fan_in, fan_out), jnp.float32, -bound, bound)
        b = jax.random.uniform(kb, (1, fan_out), jnp.float32, -bound, bound)
        return w, b

    k1, k2, k3, k4 = jax.random.split(key, 4)
    w1, b1 = linear(k1, state_size, fc1_units)
    w2, b2 = linear(k2, fc1_units, fc2_units)
    w3, b3 = linear(k3, fc2_units, action_size)
    wv, bv = linear(k4, fc2_units, 1)
    return (w1, b1, w2, b2, w3, b3, wv, bv)


def qnetwork_ref(state, params, *, apply_dueling: bool):
    """Pure-JAX f32 reference for correctness check (matches the PyTorch forward)."""
    w1, b1, w2, b2, w3, b3, wv, bv = params
    x = jnp.maximum(state @ w1 + b1, 0.0)
    x = jnp.maximum(x @ w2 + b2, 0.0)
    q = x @ w3 + b3
    if apply_dueling:
        q = q + (x @ wv + bv)
    return q


if __name__ == "__main__":
    key = jax.random.PRNGKey(0)
    B, state_size, action_size = 2, 8, 4

    pk, sk = jax.random.split(key)
    params = init_params(pk, state_size, action_size)
    state = jax.random.normal(sk, (B, state_size), jnp.float32)

    # jit the hot path so the wrapper-side pad/cast/slice fuse with the kernel.
    fwd = jax.jit(qnetwork_forward, static_argnames=("action_size", "out_dtype"))

    ok = True
    for apply_dueling in (True, False):
        # Hoisted prep: once per parameter update, not per forward call.
        prepared = prepare_params(params, apply_dueling=apply_dueling)
        out = fwd(state, prepared, action_size=action_size)
        out = jax.block_until_ready(out)
        ref = qnetwork_ref(state, params, apply_dueling=apply_dueling)
        assert out.shape == (B, action_size)
        # bf16 matmul inputs -> loosened tolerance vs the f32 reference.
        ok &= bool(jnp.allclose(out, ref, atol=5e-2, rtol=5e-2))

    assert ok, "mismatch vs reference"
    print("KERNEL_OK")
</pallas_src>

<mosaic_0001>
module attributes {stable_mosaic.version = 11 : i64} {
  func.func @kernel(%arg0: i32, %arg1: memref<16x8xbf16, #tpu.memory_space<vmem>>, %arg2: memref<8x128xbf16, #tpu.memory_space<vmem>>, %arg3: memref<128x128xbf16, #tpu.memory_space<vmem>>, %arg4: memref<128x128xbf16, #tpu.memory_space<vmem>>, %arg5: memref<1x384xf32, #tpu.memory_space<vmem>>, %arg6: memref<16x128xf32, #tpu.memory_space<vmem>>) attributes {dimension_semantics = [#tpu.dimension_semantics<parallel>], iteration_bounds = array<i64: 1>, scalar_prefetch = 0 : i64, scratch_operands = 0 : i64, tpu.core_type = #tpu.core_type<tc>, window_params = [{transform_indices = @transform_0, window_bounds = array<i64: 16, 8>}, {pipeline_mode = #tpu.pipeline_mode<synchronous>, transform_indices = @transform_1, window_bounds = array<i64: 8, 128>}, {pipeline_mode = #tpu.pipeline_mode<synchronous>, transform_indices = @transform_2, window_bounds = array<i64: 128, 128>}, {pipeline_mode = #tpu.pipeline_mode<synchronous>, transform_indices = @transform_3, window_bounds = array<i64: 128, 128>}, {pipeline_mode = #tpu.pipeline_mode<synchronous>, transform_indices = @transform_4, window_bounds = array<i64: 1, 384>}, {transform_indices = @transform_5, window_bounds = array<i64: 16, 128>}]} {
    %c0 = arith.constant 0 : index
    %c0_0 = arith.constant 0 : index
    %0 = vector.load %arg1[%c0, %c0_0] : memref<16x8xbf16, #tpu.memory_space<vmem>>, vector<16x8xbf16>
    %c0_1 = arith.constant 0 : index
    %c0_2 = arith.constant 0 : index
    %1 = vector.load %arg2[%c0_1, %c0_2] : memref<8x128xbf16, #tpu.memory_space<vmem>>, vector<8x128xbf16>
    %cst = arith.constant dense<0.000000e+00> : vector<16x128xf32>
    %2 = tpu.matmul %0, %1, %cst {dimension_numbers = #tpu.dot_dimension_numbers<[1], [0], [0], [1], [0, 0, 1, 1], [], []>} : vector<16x8xbf16>, vector<8x128xbf16>, vector<16x128xf32> -> vector<16x128xf32>
    %c0_3 = arith.constant 0 : index
    %c0_4 = arith.constant 0 : index
    %3 = vector.load %arg5[%c0_3, %c0_4] : memref<1x384xf32, #tpu.memory_space<vmem>>, vector<1x128xf32>
    %4 = vector.broadcast %3 : vector<1x128xf32> to vector<16x128xf32>
    %5 = arith.addf %2, %4 : vector<16x128xf32>
    %cst_5 = arith.constant 0.000000e+00 : f32
    %6 = vector.broadcast %cst_5 : f32 to vector<16x128xf32>
    %7 = arith.maximumf %5, %6 : vector<16x128xf32>
    %8 = arith.truncf %7 : vector<16x128xf32> to vector<16x128xbf16>
    %c0_6 = arith.constant 0 : index
    %c0_7 = arith.constant 0 : index
    %9 = vector.load %arg3[%c0_6, %c0_7] : memref<128x128xbf16, #tpu.memory_space<vmem>>, vector<128x128xbf16>
    %cst_8 = arith.constant dense<0.000000e+00> : vector<16x128xf32>
    %10 = tpu.matmul %8, %9, %cst_8 {dimension_numbers = #tpu.dot_dimension_numbers<[1], [0], [0], [1], [0, 0, 1, 1], [], []>} : vector<16x128xbf16>, vector<128x128xbf16>, vector<16x128xf32> -> vector<16x128xf32>
    %c0_9 = arith.constant 0 : index
    %c128 = arith.constant 128 : index
    %11 = vector.load %arg5[%c0_9, %c128] : memref<1x384xf32, #tpu.memory_space<vmem>>, vector<1x128xf32>
    %12 = vector.broadcast %11 : vector<1x128xf32> to vector<16x128xf32>
    %13 = arith.addf %10, %12 : vector<16x128xf32>
    %cst_10 = arith.constant 0.000000e+00 : f32
    %14 = vector.broadcast %cst_10 : f32 to vector<16x128xf32>
    %15 = arith.maximumf %13, %14 : vector<16x128xf32>
    %16 = arith.truncf %15 : vector<16x128xf32> to vector<16x128xbf16>
    %c0_11 = arith.constant 0 : index
    %c0_12 = arith.constant 0 : index
    %17 = vector.load %arg4[%c0_11, %c0_12] : memref<128x128xbf16, #tpu.memory_space<vmem>>, vector<128x128xbf16>
    %cst_13 = arith.constant dense<0.000000e+00> : vector<16x128xf32>
    %18 = tpu.matmul %16, %17, %cst_13 {dimension_numbers = #tpu.dot_dimension_numbers<[1], [0], [0], [1], [0, 0, 1, 1], [], []>} : vector<16x128xbf16>, vector<128x128xbf16>, vector<16x128xf32> -> vector<16x128xf32>
    %c0_14 = arith.constant 0 : index
    %c256 = arith.constant 256 : index
    %19 = vector.load %arg5[%c0_14, %c256] : memref<1x384xf32, #tpu.memory_space<vmem>>, vector<1x128xf32>
    %20 = vector.broadcast %19 : vector<1x128xf32> to vector<16x128xf32>
    %21 = arith.addf %18, %20 : vector<16x128xf32>
    %c0_15 = arith.constant 0 : index
    %c0_16 = arith.constant 0 : index
    %22 = vector.load %arg6[%c0_15, %c0_16] : memref<16x128xf32, #tpu.memory_space<vmem>>, vector<16x128xf32>
    tpu.vector_store %arg6[%c0_15, %c0_16], %21 {strides = array<i32>} : memref<16x128xf32, #tpu.memory_space<vmem>>, vector<16x128xf32>,
    return
  }
  func.func @transform_0(%arg0: i32) -> (i32, i32) {
    %c0_i32 = arith.constant 0 : i32
    %c0_i32_0 = arith.constant 0 : i32
    return %arg0, %c0_i32 : i32, i32
  }
  func.func @transform_1(%arg0: i32) -> (i32, i32) {
    %c0_i32 = arith.constant 0 : i32
    %c0_i32_0 = arith.constant 0 : i32
    %c0_i32_1 = arith.constant 0 : i32
    return %c0_i32, %c0_i32_0 : i32, i32
  }
  func.func @transform_2(%arg0: i32) -> (i32, i32) {
    %c0_i32 = arith.constant 0 : i32
    %c0_i32_0 = arith.constant 0 : i32
    %c0_i32_1 = arith.constant 0 : i32
    return %c0_i32, %c0_i32_0 : i32, i32
  }
  func.func @transform_3(%arg0: i32) -> (i32, i32) {
    %c0_i32 = arith.constant 0 : i32
    %c0_i32_0 = arith.constant 0 : i32
    %c0_i32_1 = arith.constant 0 : i32
    return %c0_i32, %c0_i32_0 : i32, i32
  }
  func.func @transform_4(%arg0: i32) -> (i32, i32) {
    %c0_i32 = arith.constant 0 : i32
    %c0_i32_0 = arith.constant 0 : i32
    %c0_i32_1 = arith.constant 0 : i32
    return %c0_i32, %c0_i32_0 : i32, i32
  }
  func.func @transform_5(%arg0: i32) -> (i32, i32) {
    %c0_i32 = arith.constant 0 : i32
    %c0_i32_0 = arith.constant 0 : i32
    return %arg0, %c0_i32 : i32, i32
  }
}

</mosaic_0001>

<llo_original>
// kernel: qnetwork_forward.1
$region0: #{qnetwork_forward.1}
  #allocation0 [shape = 'u32[]', space=smem, size = 0x4, offset = 0x4, fixed_abs, tag = 'smem constant byte address 0x4 - core index']
  #allocation1 [shape = 'u32[144,128]{1,0:T(1,128)}', space=vmem, size = 0x12000, scoped, tag = 'internal scratch']
  %s0 = inlined_call_operand.vmem [shape: bf16[16,8], index: 0, kind: input, shape index: {}]
  %s1 = inlined_call_operand.vmem [shape: bf16[8,128], index: 1, kind: input, shape index: {}]
  %s2 = inlined_call_operand.hbm [shape: bf16[128,128], index: 2, kind: input, shape index: {}]
  %s3 = inlined_call_operand.hbm [shape: bf16[128,128], index: 3, kind: input, shape index: {}]
  %s4 = inlined_call_operand.vmem [shape: f32[1,384], index: 4, kind: input, shape index: {}]
  %s5 = inlined_call_operand.vmem [shape: f32[16,128], index: 5, kind: output, shape index: {}]
  %s6 = sld [smem:[#allocation0]]
  $region38: #{qnetwork_forward.1} parent=0
    _
  %s8 = ssub.s32 1, %s6
  %s9 = scalar_select 0, %s8, %s6
  $region1: #{qnetwork_forward.1} parent=0
    #allocation2 [shape = 'u8[32768]{0}', space=vmem, size = 0x8000, scoped, tag = 'input window, operand 2, single buffered']
    #allocation3 [shape = 's32[1]{0}', space=sflag, size = 0x4, scoped, tag = 'scoped memory for qnetwork_forward.1']
    #allocation4 [shape = 'u8[32768]{0}', space=vmem, size = 0x8000, scoped, tag = 'input window, operand 3, single buffered']
    #allocation5 [shape = 's32[1]{0}', space=sflag, size = 0x4, scoped, tag = 'scoped memory for qnetwork_forward.1']
    %10 = vsyncpa [#allocation3], 0
    %11 = vsyncpa [#allocation5], 0
    // Predicated region
    $region2: #{qnetwork_forward.1} parent=1 // pred_check
      _
    $region3: #{qnetwork_forward.1} parent=1 // pred_check_branch
      %13 = sbr.rel (0) target = $region5
    $region4: #{qnetwork_forward.1} parent=1 // pred_region
      _
    $region5: #{qnetwork_forward.1} parent=1 // pred_fallthru
      _
    // Predicated region
    $region6: #{qnetwork_forward.1} parent=1 // pred_check
      _
    $region7: #{qnetwork_forward.1} parent=1 // pred_check_branch
      %15 = sbr.rel (0) target = $region9
    $region8: #{qnetwork_forward.1} parent=1 // pred_region
      _
    $region9: #{qnetwork_forward.1} parent=1 // pred_fallthru
      _
    // Predicated region
    $region10: #{qnetwork_forward.1} parent=1 // pred_check
      _
    $region11: #{qnetwork_forward.1} parent=1 // pred_check_branch
      %17 = sbr.rel (0) target = $region13
    $region12: #{qnetwork_forward.1} parent=1 // pred_region
      %s19 = ssub.s32 1024, 1024
      %20 = vsyncadd [#allocation3], %s19
      %s21 = sshll.u32 [#allocation2], 4
      %s22 = int_to_ptr.vmem [resolvable:$true] %s21
      %27 = dma.hbm_to_vmem [thread:$0]  %s2, 1024, %s22, [#allocation3], 64, 64, 4
    $region13: #{qnetwork_forward.1} parent=1 // pred_fallthru
      _
    // Predicated region
    $region14: #{qnetwork_forward.1} parent=1 // pred_check
      _
    $region15: #{qnetwork_forward.1} parent=1 // pred_check_branch
      %29 = sbr.rel (0) target = $region17
    $region16: #{qnetwork_forward.1} parent=1 // pred_region
      %s31 = ssub.s32 1024, 1024
      %32 = vsyncadd [#allocation5], %s31
      %s33 = sshll.u32 [#allocation4], 4
      %s34 = int_to_ptr.vmem [resolvable:$true] %s33
      %39 = dma.hbm_to_vmem [thread:$0]  %s3, 1024, %s34, [#allocation5], 64, 64, 4
    $region17: #{qnetwork_forward.1} parent=1 // pred_fallthru
      _
    // Predicated region
    $region18: #{qnetwork_forward.1} parent=1 // pred_check
      _
    $region19: #{qnetwork_forward.1} parent=1 // pred_check_branch
      %41 = sbr.rel (0) target = $region21
    $region20: #{qnetwork_forward.1} parent=1 // pred_region
      _
    $region21: #{qnetwork_forward.1} parent=1 // pred_fallthru
      _
    // Predicated region
    $region22: #{qnetwork_forward.1} parent=1 // pred_check
      _
    $region23: #{qnetwork_forward.1} parent=1 // pred_check_branch
      %43 = sbr.rel (0) target = $region25
    $region24: #{qnetwork_forward.1} parent=1 // pred_region
      %44 = dma.done [#allocation3], 1024
    $region25: #{qnetwork_forward.1} parent=1 // pred_fallthru
      _
    // Predicated region
    $region26: #{qnetwork_forward.1} parent=1 // pred_check
      _
    $region27: #{qnetwork_forward.1} parent=1 // pred_check_branch
      %46 = sbr.rel (0) target = $region29
    $region28: #{qnetwork_forward.1} parent=1 // pred_region
      %47 = dma.done [#allocation5], 1024
    $region29: #{qnetwork_forward.1} parent=1 // pred_fallthru
      _
    %v49 = vld [vmem:[%s0] sm:$0xf]
    %v50 = vld [vmem:[%s0 + $0x4] sm:$0xf]
    %v51 = vld [vmem:[%s1] sm:$0xf]
    %v52 = vld [vmem:[%s4] sm:$0x1]
    %v54 = vlaneseq
    %v55 = vshrl.u32 %v54, 7
    %v56 = vsub.s32 0, %v55
    %v57 = vrot.slane %v52, %v56
    %v61 = vunpack.c.l.b16 %v49
    %v62 = vunpack.c.l.b16 %v50
    %v63 = vpack.c.b16 %v62, %v61
    %vm64 = vcmask 64512
    %v66 = vsel %vm64, %v63, 0
    %vm68 = vcmask 1043456
    %v70 = vsel %vm68, %v51, 0
    %72 = vmatprep.subr.bf16.mxu0 0
    %73 = vmatpush1.bf16.msra.mxu0 %v70
    %74 = vmatprep.subr.bf16.mxu0 0
    %75 = vmatpush1.bf16.msra.mxu0 0
    %76 = vmatprep.subr.bf16.mxu0 0
    %77 = vmatpush1.bf16.msra.mxu0 0
    %78 = vmatprep.subr.bf16.mxu0 0
    %79 = vmatpush1.bf16.msra.mxu0 0
    %80 = vmatprep.subr.bf16.mxu0 0
    %81 = vmatpush1.bf16.msra.mxu0 0
    %82 = vmatprep.subr.bf16.mxu0 0
    %83 = vmatpush1.bf16.msra.mxu0 0
    %84 = vmatprep.subr.bf16.mxu0 0
    %85 = vmatpush1.bf16.msra.mxu0 0
    %86 = vmatprep.subr.bf16.mxu0 0
    %87 = vmatpush1.bf16.msra.mxu0 0
    %88 = vmatprep.subr.bf16.mxu0 0
    %89 = vmatpush1.bf16.msra.mxu0 0
    %90 = vmatprep.subr.bf16.mxu0 0
    %91 = vmatpush1.bf16.msra.mxu0 0
    %92 = vmatprep.subr.bf16.mxu0 0
    %93 = vmatpush1.bf16.msra.mxu0 0
    %94 = vmatprep.subr.bf16.mxu0 0
    %95 = vmatpush1.bf16.msra.mxu0 0
    %96 = vmatprep.subr.bf16.mxu0 0
    %97 = vmatpush1.bf16.msra.mxu0 0
    %98 = vmatprep.subr.bf16.mxu0 0
    %99 = vmatpush1.bf16.msra.mxu0 0
    %100 = vmatprep.subr.bf16.mxu0 0
    %101 = vmatpush1.bf16.msra.mxu0 0
    %102 = vmatprep.subr.bf16.mxu0 0
    %103 = vmatpush1.bf16.msra.mxu0 0
    %104 = vmatprep.mubr.bf16.mxu0 0
    %105 = vmatmul.mubr.bf16.gmra.mrb[0].mxu0 %v66
    %v106 = vpop.f32.mrb[0].mxu0
    %v107 = vadd.f32 %v57, %v106
    %v108 = vpop.f32.mrb[0].mxu0
    %v109 = vpop.f32.mrb[0].mxu0
    %v110 = vadd.f32 %v57, %v109
    %v111 = vpop.f32.mrb[0].mxu0
    %112 = vdwg.mxu0
    %v113 = vmax.f32 %v107, 0.0
    %v114 = vmax.f32 %v110, 0.0
    %v115 = vpack.c.bf16 %v114, %v113
    %v116 = vld [vmem:[#allocation2] sm:$0xf]
    %v117 = vld [vmem:[#allocation2 + $0x4] sm:$0xf]
    %v118 = vld [vmem:[#allocation2 + $0x8] sm:$0xf]
    %v119 = vld [vmem:[#allocation2 + $0xc] sm:$0xf]
    %v120 = vld [vmem:[#allocation2 + $0x10] sm:$0xf]
    %v121 = vld [vmem:[#allocation2 + $0x14] sm:$0xf]
    %v122 = vld [vmem:[#allocation2 + $0x18] sm:$0xf]
    %v123 = vld [vmem:[#allocation2 + $0x1c] sm:$0xf]
    %v124 = vld [vmem:[#allocation2 + $0x20] sm:$0xf]
    %v125 = vld [vmem:[#allocation2 + $0x24] sm:$0xf]
    %v126 = vld [vmem:[#allocation2 + $0x28] sm:$0xf]
    %v127 = vld [vmem:[#allocation2 + $0x2c] sm:$0xf]
    %v128 = vld [vmem:[#allocation2 + $0x30] sm:$0xf]
    %v129 = vld [vmem:[#allocation2 + $0x34] sm:$0xf]
    %v130 = vld [vmem:[#allocation2 + $0x38] sm:$0xf]
    %v131 = vld [vmem:[#allocation2 + $0x3c] sm:$0xf]
    %v132 = vld [vmem:[%s4 + $0x1] sm:$0x1]
    %v134 = vlaneseq
    %v135 = vshrl.u32 %v134, 7
    %v136 = vsub.s32 0, %v135
    %v137 = vrot.slane %v132, %v136
    %v155 = vunpack.c.l.b16 %v116
    %v156 = vunpack.c.l.b16 %v117
    %v157 = vunpack.c.l.b16 %v118
    %v158 = vunpack.c.l.b16 %v119
    %v159 = vunpack.c.l.b16 %v120
    %v160 = vunpack.c.l.b16 %v121
    %v161 = vunpack.c.l.b16 %v122
    %v162 = vunpack.c.l.b16 %v123
    %v163 = vunpack.c.l.b16 %v124
    %v164 = vunpack.c.l.b16 %v125
    %v165 = vunpack.c.l.b16 %v126
    %v166 = vunpack.c.l.b16 %v127
    %v167 = vunpack.c.l.b16 %v128
    %v168 = vunpack.c.l.b16 %v129
    %v169 = vunpack.c.l.b16 %v130
    %v170 = vunpack.c.l.b16 %v131
    %v171 = vpack.c.b16 %v156, %v155
    %v172 = vpack.c.b16 %v158, %v157
    %v173 = vpack.c.b16 %v160, %v159
    %v174 = vpack.c.b16 %v162, %v161
    %v175 = vpack.c.b16 %v164, %v163
    %v176 = vpack.c.b16 %v166, %v165
    %v177 = vpack.c.b16 %v168, %v167
    %v178 = vpack.c.b16 %v170, %v169
    %187 = vmatprep.subr.bf16.mxu0 0
    %188 = vmatpush1.bf16.msra.mxu0 %v171
    %189 = vmatprep.subr.bf16.mxu0 0
    %190 = vmatpush1.bf16.msra.mxu0 %v172
    %191 = vmatprep.subr.bf16.mxu0 0
    %192 = vmatpush1.bf16.msra.mxu0 %v173
    %193 = vmatprep.subr.bf16.mxu0 0
    %194 = vmatpush1.bf16.msra.mxu0 %v174
    %195 = vmatprep.subr.bf16.mxu0 0
    %196 = vmatpush1.bf16.msra.mxu0 %v175
    %197 = vmatprep.subr.bf16.mxu0 0
    %198 = vmatpush1.bf16.msra.mxu0 %v176
    %199 = vmatprep.subr.bf16.mxu0 0
    %200 = vmatpush1.bf16.msra.mxu0 %v177
    %201 = vmatprep.subr.bf16.mxu0 0
    %202 = vmatpush1.bf16.msra.mxu0 %v178
    %203 = vmatprep.subr.bf16.mxu0 0
    %204 = vmatpush1.bf16.msra.mxu0 0
    %205 = vmatprep.subr.bf16.mxu0 0
    %206 = vmatpush1.bf16.msra.mxu0 0
    %207 = vmatprep.subr.bf16.mxu0 0
    %208 = vmatpush1.bf16.msra.mxu0 0
    %209 = vmatprep.subr.bf16.mxu0 0
    %210 = vmatpush1.bf16.msra.mxu0 0
    %211 = vmatprep.subr.bf16.mxu0 0
    %212 = vmatpush1.bf16.msra.mxu0 0
    %213 = vmatprep.subr.bf16.mxu0 0
    %214 = vmatpush1.bf16.msra.mxu0 0
    %215 = vmatprep.subr.bf16.mxu0 0
    %216 = vmatpush1.bf16.msra.mxu0 0
    %217 = vmatprep.subr.bf16.mxu0 0
    %218 = vmatpush1.bf16.msra.mxu0 0
    %219 = vmatprep.mubr.bf16.mxu0 0
    %220 = vmatmul.mubr.bf16.gmra.mrb[0].mxu0 %v115
    %v221 = vpop.f32.mrb[0].mxu0
    %v222 = vadd.f32 %v137, %v221
    %v223 = vpop.f32.mrb[0].mxu0
    %v224 = vpop.f32.mrb[0].mxu0
    %v225 = vadd.f32 %v137, %v224
    %v226 = vpop.f32.mrb[0].mxu0
    %227 = vdwg.mxu0
    %v228 = vmax.f32 %v222, 0.0
    %v229 = vmax.f32 %v225, 0.0
    %v230 = vpack.c.bf16 %v229, %v228
    %v231 = vld [vmem:[#allocation4] sm:$0xf]
    %v232 = vld [vmem:[#allocation4 + $0x4] sm:$0xf]
    %v233 = vld [vmem:[#allocation4 + $0x8] sm:$0xf]
    %v234 = vld [vmem:[#allocation4 + $0xc] sm:$0xf]
    %v235 = vld [vmem:[#allocation4 + $0x10] sm:$0xf]
    %v236 = vld [vmem:[#allocation4 + $0x14] sm:$0xf]
    %v237 = vld [vmem:[#allocation4 + $0x18] sm:$0xf]
    %v238 = vld [vmem:[#allocation4 + $0x1c] sm:$0xf]
    %v239 = vld [vmem:[#allocation4 + $0x20] sm:$0xf]
    %v240 = vld [vmem:[#allocation4 + $0x24] sm:$0xf]
    %v241 = vld [vmem:[#allocation4 + $0x28] sm:$0xf]
    %v242 = vld [vmem:[#allocation4 + $0x2c] sm:$0xf]
    %v243 = vld [vmem:[#allocation4 + $0x30] sm:$0xf]
    %v244 = vld [vmem:[#allocation4 + $0x34] sm:$0xf]
    %v245 = vld [vmem:[#allocation4 + $0x38] sm:$0xf]
    %v246 = vld [vmem:[#allocation4 + $0x3c] sm:$0xf]
    %v247 = vld [vmem:[%s4 + $0x2] sm:$0x1]
    %v249 = vlaneseq
    %v250 = vshrl.u32 %v249, 7
    %v251 = vsub.s32 0, %v250
    %v252 = vrot.slane %v247, %v251
    %v270 = vunpack.c.l.b16 %v231
    %v271 = vunpack.c.l.b16 %v232
    %v272 = vunpack.c.l.b16 %v233
    %v273 = vunpack.c.l.b16 %v234
    %v274 = vunpack.c.l.b16 %v235
    %v275 = vunpack.c.l.b16 %v236
    %v276 = vunpack.c.l.b16 %v237
    %v277 = vunpack.c.l.b16 %v238
    %v278 = vunpack.c.l.b16 %v239
    %v279 = vunpack.c.l.b16 %v240
    %v280 = vunpack.c.l.b16 %v241
    %v281 = vunpack.c.l.b16 %v242
    %v282 = vunpack.c.l.b16 %v243
    %v283 = vunpack.c.l.b16 %v244
    %v284 = vunpack.c.l.b16 %v245
    %v285 = vunpack.c.l.b16 %v246
    %v286 = vpack.c.b16 %v271, %v270
    %v287 = vpack.c.b16 %v273, %v272
    %v288 = vpack.c.b16 %v275, %v274
    %v289 = vpack.c.b16 %v277, %v276
    %v290 = vpack.c.b16 %v279, %v278
    %v291 = vpack.c.b16 %v281, %v280
    %v292 = vpack.c.b16 %v283, %v282
    %v293 = vpack.c.b16 %v285, %v284
    %302 = vmatprep.subr.bf16.mxu0 0
    %303 = vmatpush1.bf16.msra.mxu0 %v286
    %304 = vmatprep.subr.bf16.mxu0 0
    %305 = vmatpush1.bf16.msra.mxu0 %v287
    %306 = vmatprep.subr.bf16.mxu0 0
    %307 = vmatpush1.bf16.msra.mxu0 %v288
    %308 = vmatprep.subr.bf16.mxu0 0
    %309 = vmatpush1.bf16.msra.mxu0 %v289
    %310 = vmatprep.subr.bf16.mxu0 0
    %311 = vmatpush1.bf16.msra.mxu0 %v290
    %312 = vmatprep.subr.bf16.mxu0 0
    %313 = vmatpush1.bf16.msra.mxu0 %v291
    %314 = vmatprep.subr.bf16.mxu0 0
    %315 = vmatpush1.bf16.msra.mxu0 %v292
    %316 = vmatprep.subr.bf16.mxu0 0
    %317 = vmatpush1.bf16.msra.mxu0 %v293
    %318 = vmatprep.subr.bf16.mxu0 0
    %319 = vmatpush1.bf16.msra.mxu0 0
    %320 = vmatprep.subr.bf16.mxu0 0
    %321 = vmatpush1.bf16.msra.mxu0 0
    %322 = vmatprep.subr.bf16.mxu0 0
    %323 = vmatpush1.bf16.msra.mxu0 0
    %324 = vmatprep.subr.bf16.mxu0 0
    %325 = vmatpush1.bf16.msra.mxu0 0
    %326 = vmatprep.subr.bf16.mxu0 0
    %327 = vmatpush1.bf16.msra.mxu0 0
    %328 = vmatprep.subr.bf16.mxu0 0
    %329 = vmatpush1.bf16.msra.mxu0 0
    %330 = vmatprep.subr.bf16.mxu0 0
    %331 = vmatpush1.bf16.msra.mxu0 0
    %332 = vmatprep.subr.bf16.mxu0 0
    %333 = vmatpush1.bf16.msra.mxu0 0
    %334 = vmatprep.mubr.bf16.mxu0 0
    %335 = vmatmul.mubr.bf16.gmra.mrb[0].mxu0 %v230
    %v336 = vpop.f32.mrb[0].mxu0
    %v337 = vadd.f32 %v252, %v336
    %v338 = vpop.f32.mrb[0].mxu0
    %v339 = vpop.f32.mrb[0].mxu0
    %v340 = vadd.f32 %v252, %v339
    %v341 = vpop.f32.mrb[0].mxu0
    %342 = vdwg.mxu0
    %343 = vst [vmem:[%s5] sm:$0xff] %v337
    %344 = vst [vmem:[%s5 + $0x8] sm:$0xff] %v340
    // Predicated region
    $region30: #{qnetwork_forward.1} parent=1 // pred_check
      _
    $region31: #{qnetwork_forward.1} parent=1 // pred_check_branch
      %346 = sbr.rel (0) target = $region33
    $region32: #{qnetwork_forward.1} parent=1 // pred_region
      _
    $region33: #{qnetwork_forward.1} parent=1 // pred_fallthru
      _
    // Predicated region
    $region34: #{qnetwork_forward.1} parent=1 // pred_check
      _
    $region35: #{qnetwork_forward.1} parent=1 // pred_check_branch
      %348 = sbr.rel (0) target = $region37
    $region36: #{qnetwork_forward.1} parent=1 // pred_region
      _
    $region37: #{qnetwork_forward.1} parent=1 // pred_fallthru
      _
    %349 = vsyncpa [#allocation3], 1
    %350 = vsyncpa [#allocation5], 1

</llo_original>
